<compile_context>
chip_gen: v6e
topology: v6e:2x2x1
jax: 0.10.0
libtpu: 0.0.40
codegen_flags: <defaults>
</compile_context>

<pallas_src>
import functools

import numpy as np
import jax
import jax.numpy as jnp
from jax import lax
from jax.experimental import pallas as pl
from jax.experimental.pallas import tpu as pltpu


_EPS = 1e-12  # torch.nn.functional.normalize default eps


def _head_body(x_ref, w_ref, b_ref, o_ref, inv_ref, *, metric):
    """Compute one (TN, TO) tile of  x @ normalize(w, dim=1).T + b."""
    if metric:
        # Recompute the per-row inverse L2 norm only on the first N-tile of
        # each O-tile (N is the inner grid axis, so the weight block and this
        # cached scratch stay valid for all following N-tiles).
        @pl.when(pl.program_id(1) == 0)
        def _():
            w32 = w_ref[...].astype(jnp.float32)                    # (TO, I)
            # Lane-dense row reduction via the MXU: (1, I) . (TO, I) -> (1, TO),
            # avoiding a (TO, 1) -> (1, TO) cross-lane relayout.
            ones = jnp.ones((1, w32.shape[1]), dtype=jnp.float32)
            sq = lax.dot_general(
                ones, w32 * w32,
                dimension_numbers=(((1,), (1,)), ((), ())),
                preferred_element_type=jnp.float32)
            # 1 / max(||w||, eps)  ==  rsqrt(max(||w||^2, eps^2))
            inv_ref[...] = lax.rsqrt(jnp.maximum(sq, _EPS * _EPS))

    # Raw matmul in native dtype, f32 accumulation, contraction over the last
    # dims of both operands (no transpose of the weight tile).
    acc = lax.dot_general(
        x_ref[...], w_ref[...],
        dimension_numbers=(((1,), (1,)), ((), ())),
        preferred_element_type=jnp.float32)                          # (TN, TO)

    if metric:
        acc = acc * inv_ref[...]                                     # column scale
    if b_ref is not None:
        acc = acc + b_ref[...].astype(jnp.float32)                   # (1, TO) broadcast
    o_ref[...] = acc.astype(o_ref.dtype)


def _head_kernel_bias(x_ref, w_ref, b_ref, o_ref, inv_ref, *, metric):
    _head_body(x_ref, w_ref, b_ref, o_ref, inv_ref, metric=metric)


def _head_kernel_nobias(x_ref, w_ref, o_ref, inv_ref, *, metric):
    _head_body(x_ref, w_ref, None, o_ref, inv_ref, metric=metric)


def _round_up(v, m):
    return -(-v // m) * m


def _pick_tile(dim, candidates):
    for c in candidates:
        if dim >= c and dim % c == 0:
            return c
    return dim  # full extent is always a legal block size


def linear_head(x, weight, bias=None, *, metric=True, out_dtype=None):
    """Pallas TPU forward of MetricLinear (metric=True) / nn.Linear (metric=False).

    x:      (N, in_features)
    weight: (out_features, in_features)
    bias:   (out_features,) or None
    """
    n, in_f = x.shape
    out_f, in_f_w = weight.shape
    assert in_f == in_f_w, "in_features mismatch"
    out_dtype = out_dtype or x.dtype

    # Zero-pad in_features / out_features to multiples of 128.  Zero padding
    # changes neither the dot products nor the row norms; padded output
    # columns are sliced off below (so they never reach softmax/argmax).
    in_p = _round_up(in_f, 128)
    out_p = _round_up(out_f, 128)
    if in_p != in_f:
        x = jnp.pad(x, ((0, 0), (0, in_p - in_f)))
        weight = jnp.pad(weight, ((0, 0), (0, in_p - in_f)))
    if out_p != out_f:
        weight = jnp.pad(weight, ((0, out_p - out_f), (0, 0)))
        if bias is not None:
            bias = jnp.pad(bias, (0, out_p - out_f))

    # MXU-friendly tiles (multiples of 128 on the output lane axis); fall back
    # to the full extent when it does not divide evenly.
    tn = _pick_tile(n, (256, 128, 64, 32, 16, 8))
    to = _pick_tile(out_p, (512, 256, 128))
    grid = (out_p // to, n // tn)  # O outer (parallel), N inner (arbitrary)

    has_bias = bias is not None
    kernel = functools.partial(
        _head_kernel_bias if has_bias else _head_kernel_nobias, metric=metric)

    in_specs = [
        pl.BlockSpec((tn, in_p), lambda o, i: (i, 0)),   # x block
        pl.BlockSpec((to, in_p), lambda o, i: (o, 0)),   # weight block
    ]
    args = [x, weight]
    if has_bias:
        in_specs.append(pl.BlockSpec((1, to), lambda o, i: (0, o)))
        args.append(bias.reshape(1, out_p).astype(jnp.float32))
    out_specs = pl.BlockSpec((tn, to), lambda o, i: (i, o))

    # Keep the pipelined working set explicit (matters on v7x's 64 MiB VMEM).
    out_bytes = np.dtype(out_dtype).itemsize
    work_bytes = (
        2 * tn * in_p * x.dtype.itemsize          # x, double buffered
        + 2 * to * in_p * weight.dtype.itemsize   # weight, double buffered
        + 2 * tn * to * out_bytes                 # output, double buffered
        + (2 * to * 4 if has_bias else 0)         # bias
        + to * 4)                                 # inv-norm scratch
    vmem_limit = int(min(64 * 1024 * 1024, work_bytes + (8 << 20)))

    flops = 2 * n * out_p * in_p + (3 * out_p * in_p if metric else 0)
    bytes_accessed = (n * in_p * x.dtype.itemsize
                      + out_p * in_p * weight.dtype.itemsize
                      + n * out_p * out_bytes)

    out = pl.pallas_call(
        kernel,
        out_shape=jax.ShapeDtypeStruct((n, out_p), out_dtype),
        grid_spec=pltpu.PrefetchScalarGridSpec(
            num_scalar_prefetch=0,
            grid=grid,
            in_specs=in_specs,
            out_specs=out_specs,
            scratch_shapes=[pltpu.VMEM((1, to), jnp.float32)],
        ),
        compiler_params=pltpu.CompilerParams(
            dimension_semantics=("parallel", "arbitrary"),
            vmem_limit_bytes=vmem_limit,
        ),
        cost_estimate=pl.CostEstimate(
            flops=int(flops),
            transcendentals=int(out_p if metric else 0),
            bytes_accessed=int(bytes_accessed),
        ),
    )(*args)

    return out[:, :out_f] if out_p != out_f else out


def ml_linear_cls_head_logits(x, weights, biases, *, metric=True):
    """Per-level logits (MLLinearClsHead.getlabels / the matmul part of forward)."""
    return [linear_head(x, w, b, metric=metric) for w, b in zip(weights, biases)]


def _cross_entropy(logits, labels):
    logp = jax.nn.log_softmax(logits.astype(jnp.float32), axis=-1)
    nll = -jnp.take_along_axis(logp, labels[:, None], axis=-1)[:, 0]
    return nll.mean()


def ml_linear_cls_head_forward(x, weights, biases, gt_label, ratio=None, metric=True):
    """Mirrors MLLinearClsHead.forward: logits per level -> weighted CE loss."""
    logits = ml_linear_cls_head_logits(x, weights, biases, metric=metric)
    num_levels = len(logits)
    ratio = ratio if ratio is not None else [1.0 / num_levels] * num_levels
    outputs = {}
    total = jnp.float32(0.0)
    for i, lg in enumerate(logits):
        loss_i = _cross_entropy(lg, gt_label[:, i])
        outputs[f"{i}-loss"] = loss_i
        total = total + ratio[i] * loss_i
    outputs["loss"] = total
    # TODO(synk): top-k Accuracy bookkeeping from the original head is host-side
    # metric code, kept out of the kernel.
    return outputs


def _linear_head_ref(x, weight, bias, metric):
    w = weight.astype(jnp.float32)
    if metric:
        norm = jnp.maximum(jnp.sqrt(jnp.sum(w * w, axis=1, keepdims=True)), _EPS)
        w = w / norm
    out = x.astype(jnp.float32) @ w.T
    if bias is not None:
        out = out + bias.astype(jnp.float32)
    return out.astype(x.dtype)


if __name__ == "__main__":
    # Small shapes consistent with the module: N tokens, in_channels, two
    # classification levels (non-multiples of 128 to exercise the padding path).
    N, IN_CH = 8, 32
    NUM_CLASSES = (64, 96)

    key = jax.random.PRNGKey(0)
    kx, *kws = jax.random.split(key, 1 + len(NUM_CLASSES))

    x = jax.random.normal(kx, (N, IN_CH), dtype=jnp.float32)
    # normal_init(mean=0, std=0.01, bias=0)
    weights = [0.01 * jax.random.normal(k, (nc, IN_CH), dtype=jnp.float32)
               for k, nc in zip(kws, NUM_CLASSES)]
    biases = [jnp.zeros((nc,), dtype=jnp.float32) for nc in NUM_CLASSES]
    gt_label = jnp.stack(
        [jax.random.randint(jax.random.PRNGKey(i + 1), (N,), 0, nc)
         for i, nc in enumerate(NUM_CLASSES)], axis=1)

    # Metric (cosine-style) heads — the MetricLinear path.
    logits = ml_linear_cls_head_logits(x, weights, biases, metric=True)
    logits = jax.block_until_ready(logits)

    for lg, w, b, nc in zip(logits, weights, biases, NUM_CLASSES):
        assert lg.shape == (N, nc)
        ref = _linear_head_ref(x, w, b, metric=True)
        assert jnp.allclose(lg, ref, atol=1e-4, rtol=1e-4), "metric head mismatch"

    # Non-metric (plain nn.Linear) path of the same kernel.
    plain = linear_head(x, weights[0], biases[0], metric=False)
    plain_ref = _linear_head_ref(x, weights[0], biases[0], metric=False)
    assert jnp.allclose(jax.block_until_ready(plain), plain_ref,
                        atol=1e-4, rtol=1e-4), "linear head mismatch"

    # Full forward semantics (weighted cross-entropy over levels) in plain JAX.
    outputs = ml_linear_cls_head_forward(x, weights, biases, gt_label, metric=True)
    jax.block_until_ready(outputs["loss"])

    print("KERNEL_OK")
</pallas_src>

<mosaic_0001>
module attributes {stable_mosaic.version = 11 : i64} {
  func.func @_head_kernel_bias(%arg0: i32, %arg1: i32, %arg2: memref<8x128xf32, #tpu.memory_space<vmem>>, %arg3: memref<128x128xf32, #tpu.memory_space<vmem>>, %arg4: memref<1x128xf32, #tpu.memory_space<vmem>>, %arg5: memref<8x128xf32, #tpu.memory_space<vmem>>, %arg6: memref<1x128xf32, #tpu.memory_space<vmem>>) attributes {dimension_semantics = [#tpu.dimension_semantics<parallel>, #tpu.dimension_semantics<arbitrary>], iteration_bounds = array<i64: 1, 1>, scalar_prefetch = 0 : i64, scratch_operands = 1 : i64, tpu.core_type = #tpu.core_type<tc>, window_params = [{transform_indices = @transform_0, window_bounds = array<i64: 8, 128>}, {transform_indices = @transform_1, window_bounds = array<i64: 128, 128>}, {transform_indices = @transform_2, window_bounds = array<i64: 1, 128>}, {transform_indices = @transform_3, window_bounds = array<i64: 8, 128>}]} {
    %c0_i32 = arith.constant 0 : i32
    %0 = arith.cmpi eq, %arg1, %c0_i32 : i32
    %1 = arith.extui %0 : i1 to i32
    %c0_i32_0 = arith.constant 0 : i32
    %2 = arith.cmpi ne, %1, %c0_i32_0 : i32
    scf.if %2 {
      %c0_10 = arith.constant 0 : index
      %c0_11 = arith.constant 0 : index
      %13 = vector.load %arg3[%c0_10, %c0_11] : memref<128x128xf32, #tpu.memory_space<vmem>>, vector<128x128xf32>
      %cst_12 = arith.constant 1.000000e+00 : f32
      %14 = vector.broadcast %cst_12 : f32 to vector<1x128xf32>
      %15 = arith.mulf %13, %13 : vector<128x128xf32>
      %cst_13 = arith.constant dense<0.000000e+00> : vector<1x128xf32>
      %16 = tpu.matmul %14, %15, %cst_13 {dimension_numbers = #tpu.dot_dimension_numbers<[1], [1], [0], [0], [0, 0, 1, 0], [], []>} : vector<1x128xf32>, vector<128x128xf32>, vector<1x128xf32> -> vector<1x128xf32>
      %cst_14 = arith.constant 1.000000e-24 : f32
      %17 = vector.broadcast %cst_14 : f32 to vector<1x128xf32>
      %18 = arith.maximumf %16, %17 : vector<1x128xf32>
      %19 = math.rsqrt %18 : vector<1x128xf32>
      %c0_15 = arith.constant 0 : index
      %c0_16 = arith.constant 0 : index
      %20 = vector.load %arg6[%c0_15, %c0_16] : memref<1x128xf32, #tpu.memory_space<vmem>>, vector<1x128xf32>
      tpu.vector_store %arg6[%c0_15, %c0_16], %19 {strides = array<i32>} : memref<1x128xf32, #tpu.memory_space<vmem>>, vector<1x128xf32>,
    } else {
    }
    %c0 = arith.constant 0 : index
    %c0_1 = arith.constant 0 : index
    %3 = vector.load %arg2[%c0, %c0_1] : memref<8x128xf32, #tpu.memory_space<vmem>>, vector<8x128xf32>
    %c0_2 = arith.constant 0 : index
    %c0_3 = arith.constant 0 : index
    %4 = vector.load %arg3[%c0_2, %c0_3] : memref<128x128xf32, #tpu.memory_space<vmem>>, vector<128x128xf32>
    %cst = arith.constant dense<0.000000e+00> : vector<8x128xf32>
    %5 = tpu.matmul %3, %4, %cst {dimension_numbers = #tpu.dot_dimension_numbers<[1], [1], [0], [0], [0, 0, 1, 0], [], []>} : vector<8x128xf32>, vector<128x128xf32>, vector<8x128xf32> -> vector<8x128xf32>
    %c0_4 = arith.constant 0 : index
    %c0_5 = arith.constant 0 : index
    %6 = vector.load %arg6[%c0_4, %c0_5] : memref<1x128xf32, #tpu.memory_space<vmem>>, vector<1x128xf32>
    %7 = vector.broadcast %6 : vector<1x128xf32> to vector<8x128xf32>
    %8 = arith.mulf %5, %7 : vector<8x128xf32>
    %c0_6 = arith.constant 0 : index
    %c0_7 = arith.constant 0 : index
    %9 = vector.load %arg4[%c0_6, %c0_7] : memref<1x128xf32, #tpu.memory_space<vmem>>, vector<1x128xf32>
    %10 = vector.broadcast %9 : vector<1x128xf32> to vector<8x128xf32>
    %11 = arith.addf %8, %10 : vector<8x128xf32>
    %c0_8 = arith.constant 0 : index
    %c0_9 = arith.constant 0 : index
    %12 = vector.load %arg5[%c0_8, %c0_9] : memref<8x128xf32, #tpu.memory_space<vmem>>, vector<8x128xf32>
    tpu.vector_store %arg5[%c0_8, %c0_9], %11 {strides = array<i32>} : memref<8x128xf32, #tpu.memory_space<vmem>>, vector<8x128xf32>,
    return
  }
  func.func @transform_0(%arg0: i32, %arg1: i32) -> (i32, i32) {
    %c0_i32 = arith.constant 0 : i32
    %c0_i32_0 = arith.constant 0 : i32
    return %arg1, %c0_i32 : i32, i32
  }
  func.func @transform_1(%arg0: i32, %arg1: i32) -> (i32, i32) {
    %c0_i32 = arith.constant 0 : i32
    %c0_i32_0 = arith.constant 0 : i32
    return %arg0, %c0_i32 : i32, i32
  }
  func.func @transform_2(%arg0: i32, %arg1: i32) -> (i32, i32) {
    %c0_i32 = arith.constant 0 : i32
    %c0_i32_0 = arith.constant 0 : i32
    return %c0_i32, %arg0 : i32, i32
  }
  func.func @transform_3(%arg0: i32, %arg1: i32) -> (i32, i32) {
    %c0_i32 = arith.constant 0 : i32
    return %arg1, %arg0 : i32, i32
  }
}

</mosaic_0001>

<llo_original>
// kernel: tpu_custom_call.1
$region0: #{tpu_custom_call.1}
  #allocation0 [shape = 'u32[]', space=smem, size = 0x4, offset = 0x4, fixed_abs, tag = 'smem constant byte address 0x4 - core index']
  #allocation1 [shape = 'u32[144,128]{1,0:T(1,128)}', space=vmem, size = 0x12000, scoped, tag = 'internal scratch']
  #allocation2 [shape = 'f32[1,128]{1,0:T(1,128)}', space=vmem, size = 0x200, scoped, tag = 'scratch operand']
  %s0 = inlined_call_operand.hbm [shape: f32[8,128], index: 0, kind: input, shape index: {}]
  %s1 = inlined_call_operand.hbm [shape: f32[128,128], index: 1, kind: input, shape index: {}]
  %s2 = inlined_call_operand.vmem [shape: f32[1,128], index: 2, kind: input, shape index: {}]
  %s3 = inlined_call_operand.hbm [shape: f32[8,128], index: 3, kind: output, shape index: {}]
  %s4 = sld [smem:[#allocation0]]
  $region34: #{tpu_custom_call.1} parent=0
    _
  %s6 = ssub.s32 1, %s4
  %s7 = scalar_select 0, %s6, %s4
  $region1: #{tpu_custom_call.1} parent=0
    #allocation3 [shape = 'u8[4096]{0}', space=vmem, size = 0x1000, scoped, tag = 'input window, operand 0, single buffered']
    #allocation4 [shape = 's32[1]{0}', space=sflag, size = 0x4, scoped, tag = 'scoped memory for tpu_custom_call.1']
    #allocation5 [shape = 's32[1]{0}', space=sflag, size = 0x4, scoped, tag = 'scoped memory for tpu_custom_call.1']
    #allocation6 [shape = 'u8[65536]{0}', space=vmem, size = 0x10000, scoped, tag = 'input window, operand 1, single buffered']
    #allocation7 [shape = 's32[1]{0}', space=sflag, size = 0x4, scoped, tag = 'scoped memory for tpu_custom_call.1']
    #allocation8 [shape = 'u8[4096]{0}', space=vmem, size = 0x1000, scoped, tag = 'output window, operand 0, single buffered']
    %8 = vsyncpa [#allocation4], 0
    %9 = vsyncpa [#allocation7], 0
    %10 = vsyncpa [#allocation5], 0
    // Predicated region
    $region2: #{tpu_custom_call.1} parent=1 // pred_check
      _
    $region3: #{tpu_custom_call.1} parent=1 // pred_check_branch
      %12 = sbr.rel (0) target = $region5
    $region4: #{tpu_custom_call.1} parent=1 // pred_region
      %s14 = ssub.s32 128, 128
      %15 = vsyncadd [#allocation4], %s14
      %s17 = sshll.u32 [#allocation3], 4
      %s18 = int_to_ptr.vmem [resolvable:$true] %s17
      %20 = dma.hbm_to_vmem [thread:$0]  %s0, 128, %s18, [#allocation4]
    $region5: #{tpu_custom_call.1} parent=1 // pred_fallthru
      _
    // Predicated region
    $region6: #{tpu_custom_call.1} parent=1 // pred_check
      _
    $region7: #{tpu_custom_call.1} parent=1 // pred_check_branch
      %22 = sbr.rel (0) target = $region9
    $region8: #{tpu_custom_call.1} parent=1 // pred_region
      %s24 = ssub.s32 2048, 2048
      %25 = vsyncadd [#allocation7], %s24
      %s26 = sshll.u32 [#allocation6], 4
      %s27 = int_to_ptr.vmem [resolvable:$true] %s26
      %32 = dma.hbm_to_vmem [thread:$0]  %s1, 2048, %s27, [#allocation7], 128, 128, 8
    $region9: #{tpu_custom_call.1} parent=1 // pred_fallthru
      _
    // Predicated region
    $region10: #{tpu_custom_call.1} parent=1 // pred_check
      _
    $region11: #{tpu_custom_call.1} parent=1 // pred_check_branch
      %34 = sbr.rel (0) target = $region13
    $region12: #{tpu_custom_call.1} parent=1 // pred_region
      _
    $region13: #{tpu_custom_call.1} parent=1 // pred_fallthru
      _
    // Predicated region
    $region14: #{tpu_custom_call.1} parent=1 // pred_check
      _
    $region15: #{tpu_custom_call.1} parent=1 // pred_check_branch
      %36 = sbr.rel (0) target = $region17
    $region16: #{tpu_custom_call.1} parent=1 // pred_region
      %37 = dma.done [#allocation4], 128
    $region17: #{tpu_custom_call.1} parent=1 // pred_fallthru
      _
    // Predicated region
    $region18: #{tpu_custom_call.1} parent=1 // pred_check
      _
    $region19: #{tpu_custom_call.1} parent=1 // pred_check_branch
      %39 = sbr.rel (0) target = $region21
    $region20: #{tpu_custom_call.1} parent=1 // pred_region
      %40 = dma.done [#allocation7], 2048
    $region21: #{tpu_custom_call.1} parent=1 // pred_fallthru
      _
    %p41 = scmp.eq.s32.totalorder 0, 0
    // Predicated region
    $region22: #{tpu_custom_call.1} parent=1 // pred_check
      %p42 = pneg %p41
    $region23: #{tpu_custom_call.1} parent=1 // pred_check_branch
      %44 = sbr.rel (%p42) target = $region25
    $region24: #{tpu_custom_call.1} parent=1 // pred_region
      %v45 = vld [vmem:[#allocation6] sm:$0xff]
      %v46 = vld [vmem:[#allocation6 + $0x8] sm:$0xff]
      %v47 = vld [vmem:[#allocation6 + $0x10] sm:$0xff]
      %v48 = vld [vmem:[#allocation6 + $0x18] sm:$0xff]
      %v49 = vld [vmem:[#allocation6 + $0x20] sm:$0xff]
      %v50 = vld [vmem:[#allocation6 + $0x28] sm:$0xff]
      %v51 = vld [vmem:[#allocation6 + $0x30] sm:$0xff]
      %v52 = vld [vmem:[#allocation6 + $0x38] sm:$0xff]
      %v53 = vld [vmem:[#allocation6 + $0x40] sm:$0xff]
      %v54 = vld [vmem:[#allocation6 + $0x48] sm:$0xff]
      %v55 = vld [vmem:[#allocation6 + $0x50] sm:$0xff]
      %v56 = vld [vmem:[#allocation6 + $0x58] sm:$0xff]
      %v57 = vld [vmem:[#allocation6 + $0x60] sm:$0xff]
      %v58 = vld [vmem:[#allocation6 + $0x68] sm:$0xff]
      %v59 = vld [vmem:[#allocation6 + $0x70] sm:$0xff]
      %v60 = vld [vmem:[#allocation6 + $0x78] sm:$0xff]
      %v61 = vmul.f32 %v45, %v45
      %v62 = vmul.f32 %v46, %v46
      %v63 = vmul.f32 %v47, %v47
      %v64 = vmul.f32 %v48, %v48
      %v65 = vmul.f32 %v49, %v49
      %v66 = vmul.f32 %v50, %v50
      %v67 = vmul.f32 %v51, %v51
      %v68 = vmul.f32 %v52, %v52
      %v69 = vmul.f32 %v53, %v53
      %v70 = vmul.f32 %v54, %v54
      %v71 = vmul.f32 %v55, %v55
      %v72 = vmul.f32 %v56, %v56
      %v73 = vmul.f32 %v57, %v57
      %v74 = vmul.f32 %v58, %v58
      %v75 = vmul.f32 %v59, %v59
      %v76 = vmul.f32 %v60, %v60
      %77 = vmatprep.subr.mxu0 0.0
      %78 = vmatpush1.xpose.msra.mxu0 %v76
      %79 = vmatprep.subr.mxu0 0.0
      %80 = vmatpush1.xpose.msra.mxu0 %v75
      %81 = vmatprep.subr.mxu0 0.0
      %82 = vmatpush1.xpose.msra.mxu0 %v74
      %83 = vmatprep.subr.mxu0 0.0
      %84 = vmatpush1.xpose.msra.mxu0 %v73
      %85 = vmatprep.subr.mxu0 0.0
      %86 = vmatpush1.xpose.msra.mxu0 %v72
      %87 = vmatprep.subr.mxu0 0.0
      %88 = vmatpush1.xpose.msra.mxu0 %v71
      %89 = vmatprep.subr.mxu0 0.0
      %90 = vmatpush1.xpose.msra.mxu0 %v70
      %91 = vmatprep.subr.mxu0 0.0
      %92 = vmatpush1.xpose.msra.mxu0 %v69
      %93 = vmatprep.subr.mxu0 0.0
      %94 = vmatpush1.xpose.msra.mxu0 %v68
      %95 = vmatprep.subr.mxu0 0.0
      %96 = vmatpush1.xpose.msra.mxu0 %v67
      %97 = vmatprep.subr.mxu0 0.0
      %98 = vmatpush1.xpose.msra.mxu0 %v66
      %99 = vmatprep.subr.mxu0 0.0
      %100 = vmatpush1.xpose.msra.mxu0 %v65
      %101 = vmatprep.subr.mxu0 0.0
      %102 = vmatpush1.xpose.msra.mxu0 %v64
      %103 = vmatprep.subr.mxu0 0.0
      %104 = vmatpush1.xpose.msra.mxu0 %v63
      %105 = vmatprep.subr.mxu0 0.0
      %106 = vmatpush1.xpose.msra.mxu0 %v62
      %107 = vmatprep.subr.mxu0 0.0
      %108 = vmatpush1.xpose.msra.mxu0 %v61
      %109 = vmatprep.subr.mxu0 0.0
      %110 = vmatpush2.xpose.msra.mxu0 0.0
      %111 = vmatprep.subr.mxu0 0.0
      %112 = vmatpush2.xpose.msra.mxu0 0.0
      %113 = vmatprep.subr.mxu0 0.0
      %114 = vmatpush2.xpose.msra.mxu0 0.0
      %115 = vmatprep.subr.mxu0 0.0
      %116 = vmatpush2.xpose.msra.mxu0 0.0
      %117 = vmatprep.subr.mxu0 0.0
      %118 = vmatpush2.xpose.msra.mxu0 0.0
      %119 = vmatprep.subr.mxu0 0.0
      %120 = vmatpush2.xpose.msra.mxu0 0.0
      %121 = vmatprep.subr.mxu0 0.0
      %122 = vmatpush2.xpose.msra.mxu0 0.0
      %123 = vmatprep.subr.mxu0 0.0
      %124 = vmatpush2.xpose.msra.mxu0 0.0
      %125 = vmatprep.subr.mxu0 0.0
      %126 = vmatpush2.xpose.msra.mxu0 0.0
      %127 = vmatprep.subr.mxu0 0.0
      %128 = vmatpush2.xpose.msra.mxu0 0.0
      %129 = vmatprep.subr.mxu0 0.0
      %130 = vmatpush2.xpose.msra.mxu0 0.0
      %131 = vmatprep.subr.mxu0 0.0
      %132 = vmatpush2.xpose.msra.mxu0 0.0
      %133 = vmatprep.subr.mxu0 0.0
      %134 = vmatpush2.xpose.msra.mxu0 0.0
      %135 = vmatprep.subr.mxu0 0.0
      %136 = vmatpush2.xpose.msra.mxu0 0.0
      %137 = vmatprep.subr.mxu0 0.0
      %138 = vmatpush2.xpose.msra.mxu0 0.0
      %139 = vmatprep.subr.mxu0 0.0
      %140 = vmatpush2.xpose.msra.mxu0 0.0
      %141 = vmatprep.mubr.f32.mxu0 0.0
      %142 = vmatmul.mubr.f32.gmra.mxu0 1.0
      %v143 = vpop.f32.mrf.mxu0
      %v144 = vadd.f32 0.0, %v143
      %v145 = vpop.f32.mrf.mxu0
      %146 = vdwg.mxu0
      %v147 = vmax.f32 %v144, 1e-24
      %v148 = vrsqrt.pop %v147
      %149 = vst [vmem:[#allocation2] sm:$0x1] %v148
    $region25: #{tpu_custom_call.1} parent=1 // pred_fallthru
      _
    %v150 = vld [vmem:[#allocation3] sm:$0xff]
    %v151 = vld [vmem:[#allocation6] sm:$0xff]
    %v152 = vld [vmem:[#allocation6 + $0x8] sm:$0xff]
    %v153 = vld [vmem:[#allocation6 + $0x10] sm:$0xff]
    %v154 = vld [vmem:[#allocation6 + $0x18] sm:$0xff]
    %v155 = vld [vmem:[#allocation6 + $0x20] sm:$0xff]
    %v156 = vld [vmem:[#allocation6 + $0x28] sm:$0xff]
    %v157 = vld [vmem:[#allocation6 + $0x30] sm:$0xff]
    %v158 = vld [vmem:[#allocation6 + $0x38] sm:$0xff]
    %v159 = vld [vmem:[#allocation6 + $0x40] sm:$0xff]
    %v160 = vld [vmem:[#allocation6 + $0x48] sm:$0xff]
    %v161 = vld [vmem:[#allocation6 + $0x50] sm:$0xff]
    %v162 = vld [vmem:[#allocation6 + $0x58] sm:$0xff]
    %v163 = vld [vmem:[#allocation6 + $0x60] sm:$0xff]
    %v164 = vld [vmem:[#allocation6 + $0x68] sm:$0xff]
    %v165 = vld [vmem:[#allocation6 + $0x70] sm:$0xff]
    %v166 = vld [vmem:[#allocation6 + $0x78] sm:$0xff]
    %167 = vmatprep.subr.mxu0 0.0
    %168 = vmatpush1.xpose.msra.mxu0 %v166
    %169 = vmatprep.subr.mxu0 0.0
    %170 = vmatpush1.xpose.msra.mxu0 %v165
    %171 = vmatprep.subr.mxu0 0.0
    %172 = vmatpush1.xpose.msra.mxu0 %v164
    %173 = vmatprep.subr.mxu0 0.0
    %174 = vmatpush1.xpose.msra.mxu0 %v163
    %175 = vmatprep.subr.mxu0 0.0
    %176 = vmatpush1.xpose.msra.mxu0 %v162
    %177 = vmatprep.subr.mxu0 0.0
    %178 = vmatpush1.xpose.msra.mxu0 %v161
    %179 = vmatprep.subr.mxu0 0.0
    %180 = vmatpush1.xpose.msra.mxu0 %v160
    %181 = vmatprep.subr.mxu0 0.0
    %182 = vmatpush1.xpose.msra.mxu0 %v159
    %183 = vmatprep.subr.mxu0 0.0
    %184 = vmatpush1.xpose.msra.mxu0 %v158
    %185 = vmatprep.subr.mxu0 0.0
    %186 = vmatpush1.xpose.msra.mxu0 %v157
    %187 = vmatprep.subr.mxu0 0.0
    %188 = vmatpush1.xpose.msra.mxu0 %v156
    %189 = vmatprep.subr.mxu0 0.0
    %190 = vmatpush1.xpose.msra.mxu0 %v155
    %191 = vmatprep.subr.mxu0 0.0
    %192 = vmatpush1.xpose.msra.mxu0 %v154
    %193 = vmatprep.subr.mxu0 0.0
    %194 = vmatpush1.xpose.msra.mxu0 %v153
    %195 = vmatprep.subr.mxu0 0.0
    %196 = vmatpush1.xpose.msra.mxu0 %v152
    %197 = vmatprep.subr.mxu0 0.0
    %198 = vmatpush1.xpose.msra.mxu0 %v151
    %199 = vmatprep.subr.mxu0 0.0
    %200 = vmatpush2.xpose.msra.mxu0 0.0
    %201 = vmatprep.subr.mxu0 0.0
    %202 = vmatpush2.xpose.msra.mxu0 0.0
    %203 = vmatprep.subr.mxu0 0.0
    %204 = vmatpush2.xpose.msra.mxu0 0.0
    %205 = vmatprep.subr.mxu0 0.0
    %206 = vmatpush2.xpose.msra.mxu0 0.0
    %207 = vmatprep.subr.mxu0 0.0
    %208 = vmatpush2.xpose.msra.mxu0 0.0
    %209 = vmatprep.subr.mxu0 0.0
    %210 = vmatpush2.xpose.msra.mxu0 0.0
    %211 = vmatprep.subr.mxu0 0.0
    %212 = vmatpush2.xpose.msra.mxu0 0.0
    %213 = vmatprep.subr.mxu0 0.0
    %214 = vmatpush2.xpose.msra.mxu0 0.0
    %215 = vmatprep.subr.mxu0 0.0
    %216 = vmatpush2.xpose.msra.mxu0 0.0
    %217 = vmatprep.subr.mxu0 0.0
    %218 = vmatpush2.xpose.msra.mxu0 0.0
    %219 = vmatprep.subr.mxu0 0.0
    %220 = vmatpush2.xpose.msra.mxu0 0.0
    %221 = vmatprep.subr.mxu0 0.0
    %222 = vmatpush2.xpose.msra.mxu0 0.0
    %223 = vmatprep.subr.mxu0 0.0
    %224 = vmatpush2.xpose.msra.mxu0 0.0
    %225 = vmatprep.subr.mxu0 0.0
    %226 = vmatpush2.xpose.msra.mxu0 0.0
    %227 = vmatprep.subr.mxu0 0.0
    %228 = vmatpush2.xpose.msra.mxu0 0.0
    %229 = vmatprep.subr.mxu0 0.0
    %230 = vmatpush2.xpose.msra.mxu0 0.0
    %231 = vmatprep.mubr.f32.mxu0 0.0
    %232 = vmatmul.mubr.f32.gmra.mxu0 %v150
    %v233 = vpop.f32.mrf.mxu0
    %v234 = vadd.f32 0.0, %v233
    %v235 = vpop.f32.mrf.mxu0
    %236 = vdwg.mxu0
    %v237 = vld [vmem:[#allocation2] sm:$0x1]
    %v239 = vlaneseq
    %v240 = vshrl.u32 %v239, 7
    %v241 = vsub.s32 0, %v240
    %v242 = vrot.slane %v237, %v241
    %v244 = vmul.f32 %v234, %v242
    %v245 = vld [vmem:[%s2] sm:$0x1]
    %v247 = vlaneseq
    %v248 = vshrl.u32 %v247, 7
    %v249 = vsub.s32 0, %v248
    %v250 = vrot.slane %v245, %v249
    %v252 = vadd.f32 %v244, %v250
    %253 = vst [vmem:[#allocation8] sm:$0xff] %v252
    // Predicated region
    $region26: #{tpu_custom_call.1} parent=1 // pred_check
      _
    $region27: #{tpu_custom_call.1} parent=1 // pred_check_branch
      %255 = sbr.rel (0) target = $region29
    $region28: #{tpu_custom_call.1} parent=1 // pred_region
      %s257 = ssub.s32 128, 128
      %258 = vsyncadd [#allocation5], %s257
      %s260 = sshll.u32 [#allocation8], 4
      %s261 = int_to_ptr.vmem [resolvable:$true] %s260
      %263 = dma.vmem_to_hbm [thread:$0]  %s261, 128, %s3, [#allocation5]
    $region29: #{tpu_custom_call.1} parent=1 // pred_fallthru
      _
    // Predicated region
    $region30: #{tpu_custom_call.1} parent=1 // pred_check
      _
    $region31: #{tpu_custom_call.1} parent=1 // pred_check_branch
      %265 = sbr.rel (0) target = $region33
    $region32: #{tpu_custom_call.1} parent=1 // pred_region
      %266 = dma.done [#allocation5], 128
    $region33: #{tpu_custom_call.1} parent=1 // pred_fallthru
      _
    %267 = vsyncpa [#allocation4], 1
    %268 = vsyncpa [#allocation7], 1
    %269 = vsyncpa [#allocation5], 1

</llo_original>
